<compile_context>
chip_gen: v7x
topology: tpu7x:2x2x1
jax: 0.10.0
libtpu: 0.0.40
codegen_flags: <defaults>
</compile_context>

<pallas_src>
import jax
import jax.numpy as jnp
from jax.experimental import pallas as pl
from jax.experimental.pallas import tpu as pltpu


def _highway_kernel(x_ref, xc_ref, w_ref, b_ref, o_ref, acc_ref):
    k = pl.program_id(2)

    @pl.when(k == 0)
    def _init():
        acc_ref[...] = jnp.zeros_like(acc_ref)

    # One wide matmul: columns [0, tn) are the T-linear (-> relu),
    # columns [tn, 2*tn) are the H-linear (-> sigmoid).
    acc_ref[...] += jnp.dot(x_ref[...], w_ref[...],
                            preferred_element_type=jnp.float32)

    @pl.when(k == pl.num_programs(2) - 1)
    def _epilogue():
        tn = o_ref.shape[-1]
        lin = acc_ref[...] + b_ref[...]            # (tm, 2*tn) + (1, 2*tn)
        h = jnp.maximum(lin[:, :tn], 0.0)          # relu(self.T(x))
        t = jax.nn.sigmoid(lin[:, tn:])            # sigmoid(self.H(x))
        xc = xc_ref[...].astype(jnp.float32)
        o_ref[...] = (xc + t * (h - xc)).astype(o_ref.dtype)


def _pick_tile(total, preferences):
    for p in preferences:
        if p <= total and total % p == 0:
            return p
    return total


def _vmem_limit_bytes(tm, tn, tk, itemsize=4):
    # double-buffered input/output tiles + resident f32 accumulator
    per_step = (tm * tk + tm * tn + tk * 2 * tn + 2 * tn + tm * tn) * itemsize
    acc = tm * 2 * tn * 4
    want = 2 * per_step + acc
    # Headroom for compiler scratch; stay well under v7x's 64 MiB physical VMEM.
    return int(min(max(2 * want, 16 << 20), 48 << 20))


def pack_highway_params(w_t, b_t, w_h, b_h, tn):
    """One-time packing of PyTorch-layout (out, in) weights into fused layout.

    Returns:
      w_pack: (D, 2*D) -- for each output j-tile of width tn, columns
              [j*2*tn, j*2*tn+tn) hold W_T^T's tile and the next tn hold
              W_H^T's tile (so one (tk, 2*tn) weight block feeds both linears).
      b_pack: (1, 2*D) with the matching column order.
    """
    D = w_t.shape[0]
    nj = D // tn
    wt_t = w_t.T.reshape(D, nj, tn)            # (in, out) layout, tiled on out
    wh_t = w_h.T.reshape(D, nj, tn)
    w_pack = jnp.concatenate([wt_t, wh_t], axis=-1).reshape(D, 2 * D)
    b_pack = jnp.concatenate(
        [b_t.reshape(nj, tn), b_h.reshape(nj, tn)], axis=-1).reshape(1, 2 * D)
    return w_pack, b_pack


def make_highway_layer(w_t, b_t, w_h, b_h):
    """Returns a jitted forward(x). Weight transpose/packing happens once here,
    not per call."""
    D = w_t.shape[0]
    tn = _pick_tile(D, (256, 128))     # lane-dense output-feature tile
    tk = _pick_tile(D, (256, 128))     # contraction tile
    w_pack, b_pack = pack_highway_params(w_t, b_t, w_h, b_h, tn)

    @jax.jit
    def forward(x):
        B, Dx = x.shape
        assert Dx == D, "feature size mismatch"
        tm = _pick_tile(B, (128, 64, 32, 16, 8))
        grid = (B // tm, D // tn, D // tk)

        grid_spec = pltpu.PrefetchScalarGridSpec(
            num_scalar_prefetch=0,
            grid=grid,
            in_specs=[
                pl.BlockSpec((tm, tk), lambda i, j, k: (i, k)),       # x (matmul LHS)
                pl.BlockSpec((tm, tn), lambda i, j, k: (i, j)),       # x (carry tile)
                pl.BlockSpec((tk, 2 * tn), lambda i, j, k: (k, j)),   # packed weights
                pl.BlockSpec((1, 2 * tn), lambda i, j, k: (0, j)),    # packed biases
            ],
            out_specs=pl.BlockSpec((tm, tn), lambda i, j, k: (i, j)),
            scratch_shapes=[pltpu.VMEM((tm, 2 * tn), jnp.float32)],
        )
        return pl.pallas_call(
            _highway_kernel,
            out_shape=jax.ShapeDtypeStruct((B, D), x.dtype),
            grid_spec=grid_spec,
            compiler_params=pltpu.CompilerParams(
                dimension_semantics=("parallel", "parallel", "arbitrary"),
                vmem_limit_bytes=_vmem_limit_bytes(tm, tn, tk),
            ),
        )(x, x, w_pack, b_pack)

    return forward


if __name__ == "__main__":
    key = jax.random.PRNGKey(0)

    def reference(x, w_t, b_t, w_h, b_h):
        h = jnp.maximum(x @ w_t.T + b_t, 0.0)
        t = jax.nn.sigmoid(x @ w_h.T + b_h)
        return h * t + x * (1.0 - t)

    # (B=8,  D=32):  module-sized smoke test (single-block path).
    # (B=256, D=512): exercises the full (2, 2, 2) tiled/pipelined grid.
    for B, D in [(8, 32), (256, 512)]:
        key, kx, kwh, kwt = jax.random.split(key, 4)
        x = jax.random.normal(kx, (B, D), dtype=jnp.float32)
        bound = float(D) ** -0.5
        w_h = jax.random.uniform(kwh, (D, D), jnp.float32, -bound, bound)
        w_t = jax.random.uniform(kwt, (D, D), jnp.float32, -bound, bound)
        b_h = jnp.zeros((D,), jnp.float32)           # self.H.bias.data.zero_()
        b_t = jnp.full((D,), -1.0, jnp.float32)      # self.T.bias.data.fill_(-1)

        layer = make_highway_layer(w_t, b_t, w_h, b_h)
        out = layer(x)
        jax.block_until_ready(out)

        ref = reference(x, w_t, b_t, w_h, b_h)
        assert jnp.allclose(out, ref, atol=1e-5, rtol=1e-5), (
            f"mismatch vs reference at B={B}, D={D}")

    print("KERNEL_OK")
</pallas_src>

<mosaic_0001>
module attributes {stable_mosaic.version = 11 : i64} {
  func.func @_highway_kernel(%arg0: i32, %arg1: i32, %arg2: i32, %arg3: memref<8x32xf32, #tpu.memory_space<vmem>>, %arg4: memref<8x32xf32, #tpu.memory_space<vmem>>, %arg5: memref<32x64xf32, #tpu.memory_space<vmem>>, %arg6: memref<1x64xf32, #tpu.memory_space<vmem>>, %arg7: memref<8x32xf32, #tpu.memory_space<vmem>>, %arg8: memref<8x64xf32, #tpu.memory_space<vmem>>) attributes {dimension_semantics = [#tpu.dimension_semantics<parallel>, #tpu.dimension_semantics<parallel>, #tpu.dimension_semantics<arbitrary>], iteration_bounds = array<i64: 1, 1, 1>, scalar_prefetch = 0 : i64, scratch_operands = 1 : i64, tpu.core_type = #tpu.core_type<tc>, window_params = [{transform_indices = @transform_0, window_bounds = array<i64: 8, 32>}, {transform_indices = @transform_1, window_bounds = array<i64: 8, 32>}, {transform_indices = @transform_2, window_bounds = array<i64: 32, 64>}, {transform_indices = @transform_3, window_bounds = array<i64: 1, 64>}, {transform_indices = @transform_4, window_bounds = array<i64: 8, 32>}]} {
    %c0_i32 = arith.constant 0 : i32
    %0 = arith.cmpi eq, %arg2, %c0_i32 : i32
    %1 = arith.extui %0 : i1 to i32
    %c0_i32_0 = arith.constant 0 : i32
    %2 = arith.cmpi ne, %1, %c0_i32_0 : i32
    scf.if %2 {
      %cst_10 = arith.constant 0.000000e+00 : f32
      %12 = vector.broadcast %cst_10 : f32 to vector<8x64xf32>
      %c0_11 = arith.constant 0 : index
      %c0_12 = arith.constant 0 : index
      %13 = vector.load %arg8[%c0_11, %c0_12] : memref<8x64xf32, #tpu.memory_space<vmem>>, vector<8x64xf32>
      tpu.vector_store %arg8[%c0_11, %c0_12], %12 {strides = array<i32>} : memref<8x64xf32, #tpu.memory_space<vmem>>, vector<8x64xf32>,
    } else {
    }
    %c0 = arith.constant 0 : index
    %c0_1 = arith.constant 0 : index
    %3 = vector.load %arg8[%c0, %c0_1] : memref<8x64xf32, #tpu.memory_space<vmem>>, vector<8x64xf32>
    %c0_2 = arith.constant 0 : index
    %c0_3 = arith.constant 0 : index
    %4 = vector.load %arg3[%c0_2, %c0_3] : memref<8x32xf32, #tpu.memory_space<vmem>>, vector<8x32xf32>
    %c0_4 = arith.constant 0 : index
    %c0_5 = arith.constant 0 : index
    %5 = vector.load %arg5[%c0_4, %c0_5] : memref<32x64xf32, #tpu.memory_space<vmem>>, vector<32x64xf32>
    %cst = arith.constant dense<0.000000e+00> : vector<8x64xf32>
    %6 = tpu.matmul %4, %5, %cst {dimension_numbers = #tpu.dot_dimension_numbers<[1], [0], [0], [1], [0, 0, 1, 1], [], []>} : vector<8x32xf32>, vector<32x64xf32>, vector<8x64xf32> -> vector<8x64xf32>
    %7 = arith.addf %3, %6 : vector<8x64xf32>
    %c0_6 = arith.constant 0 : index
    %c0_7 = arith.constant 0 : index
    %8 = vector.load %arg8[%c0_6, %c0_7] : memref<8x64xf32, #tpu.memory_space<vmem>>, vector<8x64xf32>
    tpu.vector_store %arg8[%c0_6, %c0_7], %7 {strides = array<i32>} : memref<8x64xf32, #tpu.memory_space<vmem>>, vector<8x64xf32>,
    %c0_i32_8 = arith.constant 0 : i32
    %9 = arith.cmpi eq, %arg2, %c0_i32_8 : i32
    %10 = arith.extui %9 : i1 to i32
    %c0_i32_9 = arith.constant 0 : i32
    %11 = arith.cmpi ne, %10, %c0_i32_9 : i32
    scf.if %11 {
      %c0_10 = arith.constant 0 : index
      %c0_11 = arith.constant 0 : index
      %12 = vector.load %arg8[%c0_10, %c0_11] : memref<8x64xf32, #tpu.memory_space<vmem>>, vector<8x64xf32>
      %c0_12 = arith.constant 0 : index
      %c0_13 = arith.constant 0 : index
      %13 = vector.load %arg6[%c0_12, %c0_13] : memref<1x64xf32, #tpu.memory_space<vmem>>, vector<1x64xf32>
      %14 = vector.broadcast %13 : vector<1x64xf32> to vector<8x64xf32>
      %15 = arith.addf %12, %14 : vector<8x64xf32>
      %16 = vector.extract_strided_slice %15 {offsets = [0, 0], sizes = [8, 32], strides = [1, 1]} : vector<8x64xf32> to vector<8x32xf32>
      %cst_14 = arith.constant 0.000000e+00 : f32
      %17 = vector.broadcast %cst_14 : f32 to vector<8x32xf32>
      %18 = arith.maximumf %16, %17 : vector<8x32xf32>
      %19 = vector.extract_strided_slice %15 {offsets = [0, 32], sizes = [8, 32], strides = [1, 1]} : vector<8x64xf32> to vector<8x32xf32>
      %20 = arith.negf %19 : vector<8x32xf32>
      %21 = math.exp %20 : vector<8x32xf32>
      %cst_15 = arith.constant 1.000000e+00 : f32
      %22 = vector.broadcast %cst_15 : f32 to vector<8x32xf32>
      %23 = arith.addf %22, %21 : vector<8x32xf32>
      %24 = arith.divf %22, %23 : vector<8x32xf32>
      %c0_16 = arith.constant 0 : index
      %c0_17 = arith.constant 0 : index
      %25 = vector.load %arg4[%c0_16, %c0_17] : memref<8x32xf32, #tpu.memory_space<vmem>>, vector<8x32xf32>
      %26 = arith.subf %18, %25 : vector<8x32xf32>
      %27 = arith.mulf %24, %26 : vector<8x32xf32>
      %28 = arith.addf %25, %27 : vector<8x32xf32>
      %c0_18 = arith.constant 0 : index
      %c0_19 = arith.constant 0 : index
      %29 = vector.load %arg7[%c0_18, %c0_19] : memref<8x32xf32, #tpu.memory_space<vmem>>, vector<8x32xf32>
      tpu.vector_store %arg7[%c0_18, %c0_19], %28 {strides = array<i32>} : memref<8x32xf32, #tpu.memory_space<vmem>>, vector<8x32xf32>,
    } else {
    }
    return
  }
  func.func @transform_0(%arg0: i32, %arg1: i32, %arg2: i32) -> (i32, i32) {
    %c0_i32 = arith.constant 0 : i32
    return %arg0, %arg2 : i32, i32
  }
  func.func @transform_1(%arg0: i32, %arg1: i32, %arg2: i32) -> (i32, i32) {
    %c0_i32 = arith.constant 0 : i32
    return %arg0, %arg1 : i32, i32
  }
  func.func @transform_2(%arg0: i32, %arg1: i32, %arg2: i32) -> (i32, i32) {
    %c0_i32 = arith.constant 0 : i32
    return %arg2, %arg1 : i32, i32
  }
  func.func @transform_3(%arg0: i32, %arg1: i32, %arg2: i32) -> (i32, i32) {
    %c0_i32 = arith.constant 0 : i32
    %c0_i32_0 = arith.constant 0 : i32
    return %c0_i32, %arg1 : i32, i32
  }
  func.func @transform_4(%arg0: i32, %arg1: i32, %arg2: i32) -> (i32, i32) {
    %c0_i32 = arith.constant 0 : i32
    return %arg0, %arg1 : i32, i32
  }
}

</mosaic_0001>

<llo_original>
// kernel: forward.1
$region0: #{forward.1}
  #allocation0 [shape = 'u32[]', space=smem, size = 0x4, offset = 0x4, fixed_abs, tag = 'smem constant byte address 0x4 - core index']
  #allocation1 [shape = 'u32[144,128]{1,0:T(1,128)}', space=vmem, size = 0x12000, scoped, tag = 'internal scratch']
  #allocation2 [shape = 'f32[8,64]{1,0:T(8,128)}', space=vmem, size = 0x1000, scoped, tag = 'scratch operand']
  %s0 = inlined_call_operand.hbm [shape: f32[8,32], index: 0, kind: input, shape index: {}, may-alias: {0,1}]
  %s1 = inlined_call_operand.hbm [shape: f32[8,32], index: 1, kind: input, shape index: {}, may-alias: {0,1}]
  %s2 = inlined_call_operand.hbm [shape: f32[32,64], index: 2, kind: input, shape index: {}]
  %s3 = inlined_call_operand.vmem [shape: f32[1,64], index: 3, kind: input, shape index: {}]
  %s4 = inlined_call_operand.hbm [shape: f32[8,32], index: 4, kind: output, shape index: {}]
  %s5 = sld [smem:[#allocation0]]
  $region46: #{forward.1} parent=0
    _
  %s7 = ssub.s32 1, %s5
  %s8 = scalar_select 0, %s7, %s5
  $region1: #{forward.1} parent=0
    #allocation3 [shape = 'u8[4096]{0}', space=vmem, size = 0x1000, scoped, tag = 'input window, operand 0, single buffered']
    #allocation4 [shape = 's32[1]{0}', space=sflag, size = 0x4, scoped, tag = 'scoped memory for forward.1']
    #allocation5 [shape = 's32[1]{0}', space=sflag, size = 0x4, scoped, tag = 'scoped memory for forward.1']
    #allocation6 [shape = 'u8[4096]{0}', space=vmem, size = 0x1000, scoped, tag = 'input window, operand 1, single buffered']
    #allocation7 [shape = 's32[1]{0}', space=sflag, size = 0x4, scoped, tag = 'scoped memory for forward.1']
    #allocation8 [shape = 'u8[16384]{0}', space=vmem, size = 0x4000, scoped, tag = 'input window, operand 2, single buffered']
    #allocation9 [shape = 'u8[4096]{0}', space=vmem, size = 0x1000, scoped, tag = 'output window, operand 0, single buffered']
    %9 = vsyncpa [#allocation4], 0
    %10 = vsyncpa [#allocation7], 0
    %11 = vsyncpa [#allocation5], 0
    // Predicated region
    $region2: #{forward.1} parent=1 // pred_check
      _
    $region3: #{forward.1} parent=1 // pred_check_branch
      %13 = sbr.rel (0) target = $region5
    $region4: #{forward.1} parent=1 // pred_region
      %s15 = ssub.s32 128, 128
      %16 = vsyncadd [#allocation4], %s15
      %s18 = sshll.u32 [#allocation3], 4
      %s19 = int_to_ptr.vmem [resolvable:$true] %s18
      %21 = dma.hbm_to_vmem [thread:$0]  %s0, 128, %s19, [#allocation4]
    $region5: #{forward.1} parent=1 // pred_fallthru
      _
    // Predicated region
    $region6: #{forward.1} parent=1 // pred_check
      _
    $region7: #{forward.1} parent=1 // pred_check_branch
      %23 = sbr.rel (0) target = $region9
    $region8: #{forward.1} parent=1 // pred_region
      %s25 = ssub.s32 128, 128
      %26 = vsyncadd [#allocation7], %s25
      %s28 = sshll.u32 [#allocation6], 4
      %s29 = int_to_ptr.vmem [resolvable:$true] %s28
      %31 = dma.hbm_to_vmem [thread:$0]  %s1, 128, %s29, [#allocation7]
    $region9: #{forward.1} parent=1 // pred_fallthru
      _
    // Predicated region
    $region10: #{forward.1} parent=1 // pred_check
      _
    $region11: #{forward.1} parent=1 // pred_check_branch
      %33 = sbr.rel (0) target = $region13
    $region12: #{forward.1} parent=1 // pred_region
      %s35 = ssub.s32 512, 512
      %36 = vsyncadd [#allocation7], %s35
      %s37 = sshll.u32 [#allocation8], 4
      %s38 = int_to_ptr.vmem [resolvable:$true] %s37
      %43 = dma.hbm_to_vmem [thread:$0]  %s2, 512, %s38, [#allocation7], 128, 128, 8
    $region13: #{forward.1} parent=1 // pred_fallthru
      _
    // Predicated region
    $region14: #{forward.1} parent=1 // pred_check
      _
    $region15: #{forward.1} parent=1 // pred_check_branch
      %45 = sbr.rel (0) target = $region17
    $region16: #{forward.1} parent=1 // pred_region
      _
    $region17: #{forward.1} parent=1 // pred_fallthru
      _
    // Predicated region
    $region18: #{forward.1} parent=1 // pred_check
      _
    $region19: #{forward.1} parent=1 // pred_check_branch
      %47 = sbr.rel (0) target = $region21
    $region20: #{forward.1} parent=1 // pred_region
      %48 = dma.done [#allocation4], 128
    $region21: #{forward.1} parent=1 // pred_fallthru
      _
    // Predicated region
    $region22: #{forward.1} parent=1 // pred_check
      _
    $region23: #{forward.1} parent=1 // pred_check_branch
      %50 = sbr.rel (0) target = $region25
    $region24: #{forward.1} parent=1 // pred_region
      %51 = dma.done [#allocation7], 128
    $region25: #{forward.1} parent=1 // pred_fallthru
      _
    // Predicated region
    $region26: #{forward.1} parent=1 // pred_check
      _
    $region27: #{forward.1} parent=1 // pred_check_branch
      %53 = sbr.rel (0) target = $region29
    $region28: #{forward.1} parent=1 // pred_region
      %54 = dma.done [#allocation7], 512
    $region29: #{forward.1} parent=1 // pred_fallthru
      _
    %p55 = scmp.eq.s32.totalorder 0, 0
    // Predicated region
    $region30: #{forward.1} parent=1 // pred_check
      %p56 = pneg %p55
    $region31: #{forward.1} parent=1 // pred_check_branch
      %58 = sbr.rel (%p56) target = $region33
    $region32: #{forward.1} parent=1 // pred_region
      %vm59 = vcmask 523264
      %60 = vst.msk [vmem:[#allocation2] sm:$0xff] %vm59, 0.0
    $region33: #{forward.1} parent=1 // pred_fallthru
      _
    %v61 = vld [vmem:[#allocation2] sm:$0xff]
    %v62 = vld [vmem:[#allocation3] sm:$0xff]
    %v63 = vld [vmem:[#allocation8] sm:$0xff]
    %v64 = vld [vmem:[#allocation8 + $0x8] sm:$0xff]
    %v65 = vld [vmem:[#allocation8 + $0x10] sm:$0xff]
    %v66 = vld [vmem:[#allocation8 + $0x18] sm:$0xff]
    %vm67 = vcmask 261120
    %v69 = vsel %vm67, %v62, 0
    %71 = vmatprep.subr.mxu0 0.0
    %72 = vmatpush1.msra.mxu0 %v63
    %73 = vmatprep.subr.mxu0 0.0
    %74 = vmatpush1.msra.mxu0 %v64
    %75 = vmatprep.subr.mxu0 0.0
    %76 = vmatpush1.msra.mxu0 %v65
    %77 = vmatprep.subr.mxu0 0.0
    %78 = vmatpush1.msra.mxu0 %v66
    %79 = vmatprep.subr.mxu0 0.0
    %80 = vmatpush1.msra.mxu0 0.0
    %81 = vmatprep.subr.mxu0 0.0
    %82 = vmatpush1.msra.mxu0 0.0
    %83 = vmatprep.subr.mxu0 0.0
    %84 = vmatpush1.msra.mxu0 0.0
    %85 = vmatprep.subr.mxu0 0.0
    %86 = vmatpush1.msra.mxu0 0.0
    %87 = vmatprep.subr.mxu0 0.0
    %88 = vmatpush1.msra.mxu0 0.0
    %89 = vmatprep.subr.mxu0 0.0
    %90 = vmatpush1.msra.mxu0 0.0
    %91 = vmatprep.subr.mxu0 0.0
    %92 = vmatpush1.msra.mxu0 0.0
    %93 = vmatprep.subr.mxu0 0.0
    %94 = vmatpush1.msra.mxu0 0.0
    %95 = vmatprep.subr.mxu0 0.0
    %96 = vmatpush1.msra.mxu0 0.0
    %97 = vmatprep.subr.mxu0 0.0
    %98 = vmatpush1.msra.mxu0 0.0
    %99 = vmatprep.subr.mxu0 0.0
    %100 = vmatpush1.msra.mxu0 0.0
    %101 = vmatprep.subr.mxu0 0.0
    %102 = vmatpush1.msra.mxu0 0.0
    %103 = vmatprep.subr.mxu0 0.0
    %104 = vmatpush1.msra.mxu0 0.0
    %105 = vmatprep.subr.mxu0 0.0
    %106 = vmatpush1.msra.mxu0 0.0
    %107 = vmatprep.subr.mxu0 0.0
    %108 = vmatpush1.msra.mxu0 0.0
    %109 = vmatprep.subr.mxu0 0.0
    %110 = vmatpush1.msra.mxu0 0.0
    %111 = vmatprep.subr.mxu0 0.0
    %112 = vmatpush1.msra.mxu0 0.0
    %113 = vmatprep.subr.mxu0 0.0
    %114 = vmatpush1.msra.mxu0 0.0
    %115 = vmatprep.subr.mxu0 0.0
    %116 = vmatpush1.msra.mxu0 0.0
    %117 = vmatprep.subr.mxu0 0.0
    %118 = vmatpush1.msra.mxu0 0.0
    %119 = vmatprep.subr.mxu0 0.0
    %120 = vmatpush1.msra.mxu0 0.0
    %121 = vmatprep.subr.mxu0 0.0
    %122 = vmatpush1.msra.mxu0 0.0
    %123 = vmatprep.subr.mxu0 0.0
    %124 = vmatpush1.msra.mxu0 0.0
    %125 = vmatprep.subr.mxu0 0.0
    %126 = vmatpush1.msra.mxu0 0.0
    %127 = vmatprep.subr.mxu0 0.0
    %128 = vmatpush1.msra.mxu0 0.0
    %129 = vmatprep.subr.mxu0 0.0
    %130 = vmatpush1.msra.mxu0 0.0
    %131 = vmatprep.subr.mxu0 0.0
    %132 = vmatpush1.msra.mxu0 0.0
    %133 = vmatprep.subr.mxu0 0.0
    %134 = vmatpush1.msra.mxu0 0.0
    %135 = vmatprep.mubr.f32.mxu0 0.0
    %136 = vmatmul.mubr.f32.gmra.mrb[0].mxu0 %v69
    %v137 = vpop.f32.mrb[0].mxu0
    %v138 = vadd.f32 0.0, %v137
    %v139 = vpop.f32.mrb[0].mxu0
    %140 = vdwg.mxu0
    %v141 = vadd.f32 %v61, %v138
    %vm142 = vcmask 523264
    %143 = vst.msk [vmem:[#allocation2] sm:$0xff] %vm142, %v141
    // Predicated region
    $region34: #{forward.1} parent=1 // pred_check
      %p144 = pneg %p55
    $region35: #{forward.1} parent=1 // pred_check_branch
      %146 = sbr.rel (%p144) target = $region37
    $region36: #{forward.1} parent=1 // pred_region
      %v147 = vld [vmem:[#allocation2] sm:$0xff]
      %v148 = vld [vmem:[%s3] sm:$0x1]
      %v150 = vlaneseq
      %v151 = vshrl.u32 %v150, 7
      %v152 = vsub.s32 0, %v151
      %v153 = vrot.slane %v148, %v152
      %v155 = vadd.f32 %v147, %v153
      %v156 = vmax.f32 %v155, 0.0
      %v157 = vxor.u32 %v155, 2147483648
      %v158 = vmul.f32 %v157, 1.442695
      %v159 = vpow.pop %v158
      %v160 = vadd.f32 %v159, 1.0
      %v161 = vrcp.pop %v160
      %v162 = vmul.f32 1.0, %v161
      %v163 = vld [vmem:[#allocation6] sm:$0xff]
      %v164 = vsub.f32 %v156, %v163
      %166 = vrot.lane.b32.xlu0 %v164, 32
      %v167 = vpop.permute.xlu0 %166
      %v169 = vmul.f32 %v162, %v167
      %171 = vrot.lane.b32.xlu0 %v169, 96
      %v172 = vpop.permute.xlu0 %171
      %v174 = vadd.f32 %v163, %v172
      %175 = vst.msk [vmem:[#allocation9] sm:$0xff] %vm67, %v174
    $region37: #{forward.1} parent=1 // pred_fallthru
      _
    // Predicated region
    $region38: #{forward.1} parent=1 // pred_check
      _
    $region39: #{forward.1} parent=1 // pred_check_branch
      %177 = sbr.rel (0) target = $region41
    $region40: #{forward.1} parent=1 // pred_region
      %s179 = ssub.s32 128, 128
      %180 = vsyncadd [#allocation5], %s179
      %s182 = sshll.u32 [#allocation9], 4
      %s183 = int_to_ptr.vmem [resolvable:$true] %s182
      %185 = dma.vmem_to_hbm [thread:$0]  %s183, 128, %s4, [#allocation5]
    $region41: #{forward.1} parent=1 // pred_fallthru
      _
    // Predicated region
    $region42: #{forward.1} parent=1 // pred_check
      _
    $region43: #{forward.1} parent=1 // pred_check_branch
      %187 = sbr.rel (0) target = $region45
    $region44: #{forward.1} parent=1 // pred_region
      %188 = dma.done [#allocation5], 128
    $region45: #{forward.1} parent=1 // pred_fallthru
      _
    %189 = vsyncpa [#allocation4], 1
    %190 = vsyncpa [#allocation7], 1
    %191 = vsyncpa [#allocation5], 1

</llo_original>
